<compile_context>
chip_gen: v5e
topology: v5e:2x2
jax: 0.10.0
libtpu: 0.0.40
codegen_flags: <defaults>
</compile_context>

<pallas_src>
import math

import jax
import jax.numpy as jnp
from jax.experimental import pallas as pl
from jax.experimental.pallas import tpu as pltpu


# ----------------------------- kernels ---------------------------------------


def _scaled_kernel(x_ref, res_ref, scale_ref, out_ref):
    # out = x + residual * scale   (scale_residual_constant already folded into scale)
    out_ref[...] = x_ref[...] + res_ref[...] * scale_ref[...]


def _plain_kernel(constant):
    # out = x + residual [* constant]   (constant is a static Python float)
    def kernel(x_ref, res_ref, out_ref):
        res = res_ref[...]
        if constant != 1.0:
            res = res * jnp.asarray(constant, dtype=res.dtype)
        out_ref[...] = x_ref[...] + res

    return kernel


# ----------------------------- tiling helpers ---------------------------------


def _sublane_pack(itemsize):
    # Rows per packed sublane tile: 8 for 32-bit, 16 for 16-bit, 32 for 8-bit dtypes.
    return max(8, 32 // itemsize)


def _choose_tile_rows(rows, width, itemsize,
                      target_block_bytes=2 * 1024 * 1024,
                      vmem_budget=12 * 1024 * 1024,
                      min_steps=4):
    """Row tile for a (rows, width) stream.

    Sized by a per-block byte target (~2 MiB) so per-step overhead is amortized,
    capped so (2 inputs + 1 output) * 2 double-buffers fit in a conservative VMEM
    budget, capped again so the grid keeps >= min_steps steps (pipelining + megacore),
    and rounded to the dtype's sublane packing so stores stay unmasked.
    """
    pack = _sublane_pack(itemsize)
    row_bytes = max(1, width * itemsize)
    cap = max(1, target_block_bytes // row_bytes)                 # byte-targeted block
    cap = min(cap, max(1, vmem_budget // (6 * row_bytes)))        # 3 streams * 2 buffers
    cap = min(cap, max(pack, -(-rows // min_steps)))              # keep >= min_steps steps
    cap = max(pack, (cap // pack) * pack)                         # sublane-packing multiple
    if rows <= cap:
        return rows                                               # full extent -> legal block
    return cap


# ----------------------------- wrapper ----------------------------------------


def residual_forward(x, residual, residual_scale=None, scale_residual_constant=1.0):
    """x, residual: (..., D). residual_scale: optional (D,). Returns x + scaled residual."""
    orig_shape = x.shape
    dim = orig_shape[-1]
    rows = x.size // dim
    itemsize = jnp.dtype(x.dtype).itemsize
    constant = float(scale_residual_constant)
    residual = residual.astype(x.dtype)
    cparams = pltpu.CompilerParams(dimension_semantics=("parallel",))

    if residual_scale is not None:
        # ---- scaled path: out = x + residual * (residual_scale * constant) ----
        # Group g original rows per logical row so the block last dim (g*dim) is a
        # multiple of 128 (lane-dense, unmasked stores); tile the scale vector g times.
        g = 1
        if dim % 128 != 0:
            cand = 128 // math.gcd(dim, 128)
            if rows % cand == 0:
                g = cand
        width = g * dim
        rows2 = rows // g

        x2 = x.reshape(rows2, width)
        r2 = residual.reshape(rows2, width)
        scale_vec = residual_scale.astype(x.dtype)
        if constant != 1.0:
            scale_vec = scale_vec * jnp.asarray(constant, x.dtype)   # fold constant host-side
        scale2 = jnp.tile(scale_vec, g).reshape(1, width)

        tile_r = _choose_tile_rows(rows2, width, itemsize)
        grid = (pl.cdiv(rows2, tile_r),)
        data_spec = pl.BlockSpec((tile_r, width), lambda i: (i, 0))

        out = pl.pallas_call(
            _scaled_kernel,
            out_shape=jax.ShapeDtypeStruct((rows2, width), x.dtype),
            grid=grid,
            in_specs=[
                data_spec,                                    # x tile
                data_spec,                                    # residual tile
                pl.BlockSpec((1, width), lambda i: (0, 0)),   # per-dim scale (broadcast)
            ],
            out_specs=data_spec,
            compiler_params=cparams,
            cost_estimate=pl.CostEstimate(
                flops=2 * rows * dim,
                transcendentals=0,
                bytes_accessed=(3 * rows * dim + dim) * itemsize,
            ),
        )(x2, r2, scale2)
        return out.reshape(orig_shape)

    # ---- plain path: out = x + residual [* constant] ----
    # Fully flatten and pick a lane-dense width L (multiple of 128) dividing N.
    n = rows * dim
    if n % 128 == 0:
        width = 128
        while n % (width * 2) == 0 and width * 2 <= 1024:
            width *= 2
    else:
        width = dim   # fallback: trailing lanes masked, still correct
    rows2 = n // width

    x2 = x.reshape(rows2, width)
    r2 = residual.reshape(rows2, width)

    tile_r = _choose_tile_rows(rows2, width, itemsize)
    grid = (pl.cdiv(rows2, tile_r),)
    data_spec = pl.BlockSpec((tile_r, width), lambda i: (i, 0))

    out = pl.pallas_call(
        _plain_kernel(constant),
        out_shape=jax.ShapeDtypeStruct((rows2, width), x.dtype),
        grid=grid,
        in_specs=[data_spec, data_spec],
        out_specs=data_spec,
        compiler_params=cparams,
        cost_estimate=pl.CostEstimate(
            flops=(2 if constant != 1.0 else 1) * n,
            transcendentals=0,
            bytes_accessed=3 * n * itemsize,
        ),
    )(x2, r2)
    return out.reshape(orig_shape)


# ----------------------------- reference & test --------------------------------


def _reference(x, residual, residual_scale=None, scale_residual_constant=1.0):
    if residual_scale is not None:
        residual = residual * residual_scale
    if scale_residual_constant != 1.0:
        residual = residual * scale_residual_constant
    return x + residual


if __name__ == "__main__":
    key = jax.random.PRNGKey(0)
    B, S, D = 2, 8, 32
    k1, k2, k3 = jax.random.split(key, 3)
    x = jax.random.normal(k1, (B, S, D), dtype=jnp.float32)
    residual = jax.random.normal(k2, (B, S, D), dtype=jnp.float32)

    # Config 1: scale_residual=True (per-dim parameter), scale_residual_constant=0.5.
    residual_scale = jax.random.normal(k3, (D,), dtype=jnp.float32)
    out1 = jax.block_until_ready(residual_forward(x, residual, residual_scale, 0.5))
    ref1 = _reference(x, residual, residual_scale, 0.5)
    assert out1.shape == x.shape and out1.dtype == x.dtype
    assert jnp.allclose(out1, ref1, atol=1e-6, rtol=1e-6), "mismatch (scaled path)"

    # Config 2: default module (no residual_scale, constant = 1.0) -> plain add.
    out2 = jax.block_until_ready(residual_forward(x, residual, None, 1.0))
    ref2 = _reference(x, residual, None, 1.0)
    assert jnp.allclose(out2, ref2, atol=1e-6, rtol=1e-6), "mismatch (plain path)"

    # Config 3: no residual_scale but constant != 1 -> plain kernel with static scalar.
    out3 = jax.block_until_ready(residual_forward(x, residual, None, 2.0))
    ref3 = _reference(x, residual, None, 2.0)
    assert jnp.allclose(out3, ref3, atol=1e-6, rtol=1e-6), "mismatch (constant-only path)"

    print("KERNEL_OK")
</pallas_src>

<mosaic_0001>
module attributes {stable_mosaic.version = 11 : i64} {
  func.func @_scaled_kernel(%arg0: i32, %arg1: memref<4x128xf32, #tpu.memory_space<vmem>>, %arg2: memref<4x128xf32, #tpu.memory_space<vmem>>, %arg3: memref<1x128xf32, #tpu.memory_space<vmem>>, %arg4: memref<4x128xf32, #tpu.memory_space<vmem>>) attributes {dimension_semantics = [#tpu.dimension_semantics<parallel>], iteration_bounds = array<i64: 1>, scalar_prefetch = 0 : i64, scratch_operands = 0 : i64, tpu.core_type = #tpu.core_type<tc>, window_params = [{transform_indices = @transform_0, window_bounds = array<i64: 4, 128>}, {transform_indices = @transform_1, window_bounds = array<i64: 4, 128>}, {pipeline_mode = #tpu.pipeline_mode<synchronous>, transform_indices = @transform_2, window_bounds = array<i64: 1, 128>}, {transform_indices = @transform_3, window_bounds = array<i64: 4, 128>}]} {
    %c0 = arith.constant 0 : index
    %c0_0 = arith.constant 0 : index
    %0 = vector.load %arg1[%c0, %c0_0] : memref<4x128xf32, #tpu.memory_space<vmem>>, vector<4x128xf32>
    %c0_1 = arith.constant 0 : index
    %c0_2 = arith.constant 0 : index
    %1 = vector.load %arg2[%c0_1, %c0_2] : memref<4x128xf32, #tpu.memory_space<vmem>>, vector<4x128xf32>
    %c0_3 = arith.constant 0 : index
    %c0_4 = arith.constant 0 : index
    %2 = vector.load %arg3[%c0_3, %c0_4] : memref<1x128xf32, #tpu.memory_space<vmem>>, vector<1x128xf32>
    %3 = vector.broadcast %2 : vector<1x128xf32> to vector<4x128xf32>
    %4 = arith.mulf %1, %3 : vector<4x128xf32>
    %5 = arith.addf %0, %4 : vector<4x128xf32>
    %c0_5 = arith.constant 0 : index
    %c0_6 = arith.constant 0 : index
    %6 = vector.load %arg4[%c0_5, %c0_6] : memref<4x128xf32, #tpu.memory_space<vmem>>, vector<4x128xf32>
    tpu.vector_store %arg4[%c0_5, %c0_6], %5 {strides = array<i32>} : memref<4x128xf32, #tpu.memory_space<vmem>>, vector<4x128xf32>,
    return
  }
  func.func @transform_0(%arg0: i32) -> (i32, i32) {
    %c0_i32 = arith.constant 0 : i32
    %c0_i32_0 = arith.constant 0 : i32
    return %arg0, %c0_i32 : i32, i32
  }
  func.func @transform_1(%arg0: i32) -> (i32, i32) {
    %c0_i32 = arith.constant 0 : i32
    %c0_i32_0 = arith.constant 0 : i32
    return %arg0, %c0_i32 : i32, i32
  }
  func.func @transform_2(%arg0: i32) -> (i32, i32) {
    %c0_i32 = arith.constant 0 : i32
    %c0_i32_0 = arith.constant 0 : i32
    %c0_i32_1 = arith.constant 0 : i32
    return %c0_i32, %c0_i32_0 : i32, i32
  }
  func.func @transform_3(%arg0: i32) -> (i32, i32) {
    %c0_i32 = arith.constant 0 : i32
    %c0_i32_0 = arith.constant 0 : i32
    return %arg0, %c0_i32 : i32, i32
  }
}

</mosaic_0001>

<llo_original>
// kernel: tpu_custom_call.1
$region0: #{tpu_custom_call.1}
  #allocation0 [shape = 'u32[]', space=smem, size = 0x4, offset = 0x4, fixed_abs, tag = 'smem constant byte address 0x4 - core index']
  #allocation1 [shape = 'u32[72,128]{1,0:T(1,128)}', space=vmem, size = 0x9000, scoped, tag = 'internal scratch']
  %s0 = inlined_call_operand.hbm [shape: f32[4,128], index: 0, kind: input, shape index: {}]
  %s1 = inlined_call_operand.hbm [shape: f32[4,128], index: 1, kind: input, shape index: {}]
  %s2 = inlined_call_operand.vmem [shape: f32[1,128], index: 2, kind: input, shape index: {}]
  %s3 = inlined_call_operand.hbm [shape: f32[4,128], index: 3, kind: output, shape index: {}]
  %s4 = sld [smem:[#allocation0]]
  $region30: #{tpu_custom_call.1} parent=0
    _
  %s6 = ssub.s32 1, %s4
  %s7 = scalar_select 0, %s6, %s4
  $region1: #{tpu_custom_call.1} parent=0
    #allocation2 [shape = 'u8[2048]{0}', space=vmem, size = 0x800, scoped, tag = 'input window, operand 0, single buffered']
    #allocation3 [shape = 's32[1]{0}', space=sflag, size = 0x4, scoped, tag = 'scoped memory for tpu_custom_call.1']
    #allocation4 [shape = 's32[1]{0}', space=sflag, size = 0x4, scoped, tag = 'scoped memory for tpu_custom_call.1']
    #allocation5 [shape = 'u8[2048]{0}', space=vmem, size = 0x800, scoped, tag = 'input window, operand 1, single buffered']
    #allocation6 [shape = 's32[1]{0}', space=sflag, size = 0x4, scoped, tag = 'scoped memory for tpu_custom_call.1']
    #allocation7 [shape = 'u8[2048]{0}', space=vmem, size = 0x800, scoped, tag = 'output window, operand 0, single buffered']
    %8 = vsyncpa [#allocation3], 0
    %9 = vsyncpa [#allocation6], 0
    %10 = vsyncpa [#allocation4], 0
    // Predicated region
    $region2: #{tpu_custom_call.1} parent=1 // pred_check
      _
    $region3: #{tpu_custom_call.1} parent=1 // pred_check_branch
      %12 = sbr.rel (0) target = $region5
    $region4: #{tpu_custom_call.1} parent=1 // pred_region
      %14 = vsyncadd [#allocation3], 0
      %s16 = sshll.u32 %s0, 4
      %s17 = int_to_ptr.hbm [resolvable:$true] %s16
      %s18 = sshll.u32 [#allocation2], 4
      %s19 = int_to_ptr.vmem [resolvable:$true] %s18
      %21 = dma.hbm_to_vmem [thread:$0]  %s17, 64, %s19, [#allocation3]
    $region5: #{tpu_custom_call.1} parent=1 // pred_fallthru
      _
    // Predicated region
    $region6: #{tpu_custom_call.1} parent=1 // pred_check
      _
    $region7: #{tpu_custom_call.1} parent=1 // pred_check_branch
      %23 = sbr.rel (0) target = $region9
    $region8: #{tpu_custom_call.1} parent=1 // pred_region
      %25 = vsyncadd [#allocation6], 0
      %s27 = sshll.u32 %s1, 4
      %s28 = int_to_ptr.hbm [resolvable:$true] %s27
      %s29 = sshll.u32 [#allocation5], 4
      %s30 = int_to_ptr.vmem [resolvable:$true] %s29
      %32 = dma.hbm_to_vmem [thread:$0]  %s28, 64, %s30, [#allocation6]
    $region9: #{tpu_custom_call.1} parent=1 // pred_fallthru
      _
    // Predicated region
    $region10: #{tpu_custom_call.1} parent=1 // pred_check
      _
    $region11: #{tpu_custom_call.1} parent=1 // pred_check_branch
      %34 = sbr.rel (0) target = $region13
    $region12: #{tpu_custom_call.1} parent=1 // pred_region
      _
    $region13: #{tpu_custom_call.1} parent=1 // pred_fallthru
      _
    // Predicated region
    $region14: #{tpu_custom_call.1} parent=1 // pred_check
      _
    $region15: #{tpu_custom_call.1} parent=1 // pred_check_branch
      %36 = sbr.rel (0) target = $region17
    $region16: #{tpu_custom_call.1} parent=1 // pred_region
      %38 = dma.done [#allocation3], 64
    $region17: #{tpu_custom_call.1} parent=1 // pred_fallthru
      _
    // Predicated region
    $region18: #{tpu_custom_call.1} parent=1 // pred_check
      _
    $region19: #{tpu_custom_call.1} parent=1 // pred_check_branch
      %40 = sbr.rel (0) target = $region21
    $region20: #{tpu_custom_call.1} parent=1 // pred_region
      %42 = dma.done [#allocation6], 64
    $region21: #{tpu_custom_call.1} parent=1 // pred_fallthru
      _
    %v43 = vld [vmem:[#allocation2] sm:$0xf]
    %v44 = vld [vmem:[#allocation5] sm:$0xf]
    %v45 = vld [vmem:[%s2] sm:$0x1]
    %v47 = vperm.slane %v45, 0
    %v49 = vmul.f32 %v44, %v47
    %v50 = vadd.f32 %v43, %v49
    %51 = vst [vmem:[#allocation7] sm:$0xf] %v50
    // Predicated region
    $region22: #{tpu_custom_call.1} parent=1 // pred_check
      _
    $region23: #{tpu_custom_call.1} parent=1 // pred_check_branch
      %53 = sbr.rel (0) target = $region25
    $region24: #{tpu_custom_call.1} parent=1 // pred_region
      %55 = vsyncadd [#allocation4], 0
      %s57 = sshll.u32 [#allocation7], 4
      %s58 = int_to_ptr.vmem [resolvable:$true] %s57
      %s59 = sshll.u32 %s3, 4
      %s60 = int_to_ptr.hbm [resolvable:$true] %s59
      %62 = dma.vmem_to_hbm [thread:$0]  %s58, 64, %s60, [#allocation4]
    $region25: #{tpu_custom_call.1} parent=1 // pred_fallthru
      _
    // Predicated region
    $region26: #{tpu_custom_call.1} parent=1 // pred_check
      _
    $region27: #{tpu_custom_call.1} parent=1 // pred_check_branch
      %64 = sbr.rel (0) target = $region29
    $region28: #{tpu_custom_call.1} parent=1 // pred_region
      %66 = dma.done [#allocation4], 64
    $region29: #{tpu_custom_call.1} parent=1 // pred_fallthru
      _
    %67 = vsyncpa [#allocation3], 1
    %68 = vsyncpa [#allocation6], 1
    %69 = vsyncpa [#allocation4], 1

</llo_original>
